<compile_context>
chip_gen: v7x
topology: tpu7x:2x2x1
jax: 0.10.0
libtpu: 0.0.40
codegen_flags: <defaults>
</compile_context>

<pallas_src>
import jax
import jax.numpy as jnp
from jax.experimental import pallas as pl
from jax.experimental.pallas import tpu as pltpu


D_PAD = 128    # padded layer width = 128-lane vreg width
TILE_B = 128   # batch tile per grid step


def make_mlp_kernel(num_layers):
    """relu(x@W0+b0) ... @W_{L-1}+b_{L-1} (no relu on the last layer)."""

    def kernel(x_ref, w_ref, b_ref, out_ref):
        h = x_ref[...]                                    # (TILE_B, D_PAD) f32
        for i in range(num_layers):                       # static unroll
            w = w_ref[i]                                  # (D_PAD, D_PAD)
            b = b_ref[i]                                  # (1, D_PAD)
            h = jnp.dot(h, w, preferred_element_type=jnp.float32) + b
            if i < num_layers - 1:
                h = jnp.maximum(h, 0.0)                   # ReLU (hidden layers)
        out_ref[...] = h.astype(out_ref.dtype)

    return kernel


def dqn_forward(x, params, *, tile_b=TILE_B, d_pad=D_PAD):
    """x: [B, n_observations] f32; params: list of (W[in_dim,out_dim], b[out_dim])."""
    num_layers = len(params)
    B, n_in = x.shape
    n_out = params[-1][0].shape[1]

    # Pack all weights/biases into two zero-padded slabs -> 3 DMAs total.
    w_slab = jnp.zeros((num_layers, d_pad, d_pad), jnp.float32)
    b_slab = jnp.zeros((num_layers, 1, d_pad), jnp.float32)
    for i, (w, b) in enumerate(params):
        w_slab = w_slab.at[i, : w.shape[0], : w.shape[1]].set(w)
        b_slab = b_slab.at[i, 0, : b.shape[-1]].set(b.reshape(-1))

    # Zero-pad batch to a multiple of tile_b and features to d_pad.
    num_tiles = pl.cdiv(B, tile_b)
    b_pad = num_tiles * tile_b
    x_p = jnp.zeros((b_pad, d_pad), jnp.float32).at[:B, :n_in].set(x)

    flops = 2 * b_pad * sum(w.shape[0] * w.shape[1] for w, _ in params)
    bytes_accessed = 4 * (x_p.size + w_slab.size + b_slab.size + b_pad * d_pad)

    out_p = pl.pallas_call(
        make_mlp_kernel(num_layers),
        out_shape=jax.ShapeDtypeStruct((b_pad, d_pad), jnp.float32),
        grid=(num_tiles,),
        in_specs=[
            # Activations: one batch tile per grid step (pipelined).
            pl.BlockSpec((tile_b, d_pad), lambda i: (i, 0)),
            # Weights/biases: constant block index -> VMEM-resident, no re-DMA.
            pl.BlockSpec((num_layers, d_pad, d_pad), lambda i: (0, 0, 0)),
            pl.BlockSpec((num_layers, 1, d_pad), lambda i: (0, 0, 0)),
        ],
        out_specs=pl.BlockSpec((tile_b, d_pad), lambda i: (i, 0)),
        compiler_params=pltpu.CompilerParams(
            dimension_semantics=("parallel",),   # shard batch tiles on v7x's 2 TCs
        ),
        cost_estimate=pl.CostEstimate(
            flops=flops, transcendentals=0, bytes_accessed=bytes_accessed),
    )(x_p, w_slab, b_slab)

    # Crop the lane/batch padding: real output is the first n_out lanes.
    return out_p[:B, :n_out]


def init_dqn_params(key, n_observations, hidden_dim, n_actions):
    """PyTorch-Linear-style init: U(-1/sqrt(fan_in), 1/sqrt(fan_in)).

    Weights are stored pre-transposed as [in_dim, out_dim] so the kernel
    computes h @ W + b (same math as PyTorch's x @ W.T + b).
    """
    dims = [n_observations] + list(hidden_dim) + [n_actions]
    params = []
    for i in range(len(dims) - 1):
        in_d, out_d = dims[i], dims[i + 1]
        key, kw, kb = jax.random.split(key, 3)
        bound = 1.0 / (in_d ** 0.5)
        w = jax.random.uniform(kw, (in_d, out_d), jnp.float32, -bound, bound)
        b = jax.random.uniform(kb, (out_d,), jnp.float32, -bound, bound)
        params.append((w, b))
    return params


def dqn_reference(x, params):
    """Pure-JAX reference matching the PyTorch forward."""
    h = x
    for i, (w, b) in enumerate(params):
        h = h @ w + b
        if i < len(params) - 1:
            h = jnp.maximum(h, 0.0)
    return h


if __name__ == "__main__":
    # Module-consistent shapes: flattened board observation (48 features),
    # two hidden layers, 4 actions. Batch=256 so the kernel actually exercises
    # the batch grid (2 tiles of 128) per the perf feedback.
    batch = 256
    n_observations = 48
    hidden_dim = (64, 32)
    n_actions = 4

    key = jax.random.PRNGKey(0)
    key, kx = jax.random.split(key)
    x = jax.random.normal(kx, (batch, n_observations), jnp.float32)

    params = init_dqn_params(key, n_observations, hidden_dim, n_actions)

    out = dqn_forward(x, params)
    out = jax.block_until_ready(out)

    ref = dqn_reference(x, params)
    assert out.shape == (batch, n_actions)
    assert jnp.allclose(out, ref, atol=1e-4, rtol=1e-4), "mismatch vs reference"

    print("KERNEL_OK")
</pallas_src>

<mosaic_0001>
module attributes {stable_mosaic.version = 11 : i64} {
  func.func @kernel(%arg0: i32, %arg1: memref<128x128xf32, #tpu.memory_space<vmem>>, %arg2: memref<3x128x128xf32, #tpu.memory_space<vmem>>, %arg3: memref<3x1x128xf32, #tpu.memory_space<vmem>>, %arg4: memref<128x128xf32, #tpu.memory_space<vmem>>) attributes {dimension_semantics = [#tpu.dimension_semantics<parallel>], iteration_bounds = array<i64: 2>, scalar_prefetch = 0 : i64, scratch_operands = 0 : i64, tpu.core_type = #tpu.core_type<tc>, window_params = [{transform_indices = @transform_0, window_bounds = array<i64: 128, 128>}, {pipeline_mode = #tpu.pipeline_mode<synchronous>, transform_indices = @transform_1, window_bounds = array<i64: 3, 128, 128>}, {pipeline_mode = #tpu.pipeline_mode<synchronous>, transform_indices = @transform_2, window_bounds = array<i64: 3, 1, 128>}, {transform_indices = @transform_3, window_bounds = array<i64: 128, 128>}]} {
    %c0 = arith.constant 0 : index
    %c0_0 = arith.constant 0 : index
    %0 = vector.load %arg1[%c0, %c0_0] : memref<128x128xf32, #tpu.memory_space<vmem>>, vector<128x128xf32>
    %c0_1 = arith.constant 0 : index
    %c0_2 = arith.constant 0 : index
    %c0_3 = arith.constant 0 : index
    %1 = vector.load %arg2[%c0_1, %c0_2, %c0_3] : memref<3x128x128xf32, #tpu.memory_space<vmem>>, vector<1x128x128xf32>
    %2 = vector.shape_cast %1 : vector<1x128x128xf32> to vector<128x128xf32>
    %c0_4 = arith.constant 0 : index
    %c0_5 = arith.constant 0 : index
    %c0_6 = arith.constant 0 : index
    %3 = vector.load %arg3[%c0_4, %c0_5, %c0_6] : memref<3x1x128xf32, #tpu.memory_space<vmem>>, vector<1x1x128xf32>
    %4 = vector.shape_cast %3 : vector<1x1x128xf32> to vector<1x128xf32>
    %cst = arith.constant dense<0.000000e+00> : vector<128x128xf32>
    %5 = tpu.matmul %0, %2, %cst {dimension_numbers = #tpu.dot_dimension_numbers<[1], [0], [0], [1], [0, 0, 1, 1], [], []>} : vector<128x128xf32>, vector<128x128xf32>, vector<128x128xf32> -> vector<128x128xf32>
    %6 = vector.broadcast %4 : vector<1x128xf32> to vector<128x128xf32>
    %7 = arith.addf %5, %6 : vector<128x128xf32>
    %cst_7 = arith.constant 0.000000e+00 : f32
    %8 = vector.broadcast %cst_7 : f32 to vector<128x128xf32>
    %9 = arith.maximumf %7, %8 : vector<128x128xf32>
    %c1 = arith.constant 1 : index
    %c0_8 = arith.constant 0 : index
    %c0_9 = arith.constant 0 : index
    %10 = vector.load %arg2[%c1, %c0_8, %c0_9] : memref<3x128x128xf32, #tpu.memory_space<vmem>>, vector<1x128x128xf32>
    %11 = vector.shape_cast %10 : vector<1x128x128xf32> to vector<128x128xf32>
    %c1_10 = arith.constant 1 : index
    %c0_11 = arith.constant 0 : index
    %c0_12 = arith.constant 0 : index
    %12 = vector.load %arg3[%c1_10, %c0_11, %c0_12] : memref<3x1x128xf32, #tpu.memory_space<vmem>>, vector<1x1x128xf32>
    %13 = vector.shape_cast %12 : vector<1x1x128xf32> to vector<1x128xf32>
    %cst_13 = arith.constant dense<0.000000e+00> : vector<128x128xf32>
    %14 = tpu.matmul %9, %11, %cst_13 {dimension_numbers = #tpu.dot_dimension_numbers<[1], [0], [0], [1], [0, 0, 1, 1], [], []>} : vector<128x128xf32>, vector<128x128xf32>, vector<128x128xf32> -> vector<128x128xf32>
    %15 = vector.broadcast %13 : vector<1x128xf32> to vector<128x128xf32>
    %16 = arith.addf %14, %15 : vector<128x128xf32>
    %cst_14 = arith.constant 0.000000e+00 : f32
    %17 = vector.broadcast %cst_14 : f32 to vector<128x128xf32>
    %18 = arith.maximumf %16, %17 : vector<128x128xf32>
    %c2 = arith.constant 2 : index
    %c0_15 = arith.constant 0 : index
    %c0_16 = arith.constant 0 : index
    %19 = vector.load %arg2[%c2, %c0_15, %c0_16] : memref<3x128x128xf32, #tpu.memory_space<vmem>>, vector<1x128x128xf32>
    %20 = vector.shape_cast %19 : vector<1x128x128xf32> to vector<128x128xf32>
    %c2_17 = arith.constant 2 : index
    %c0_18 = arith.constant 0 : index
    %c0_19 = arith.constant 0 : index
    %21 = vector.load %arg3[%c2_17, %c0_18, %c0_19] : memref<3x1x128xf32, #tpu.memory_space<vmem>>, vector<1x1x128xf32>
    %22 = vector.shape_cast %21 : vector<1x1x128xf32> to vector<1x128xf32>
    %cst_20 = arith.constant dense<0.000000e+00> : vector<128x128xf32>
    %23 = tpu.matmul %18, %20, %cst_20 {dimension_numbers = #tpu.dot_dimension_numbers<[1], [0], [0], [1], [0, 0, 1, 1], [], []>} : vector<128x128xf32>, vector<128x128xf32>, vector<128x128xf32> -> vector<128x128xf32>
    %24 = vector.broadcast %22 : vector<1x128xf32> to vector<128x128xf32>
    %25 = arith.addf %23, %24 : vector<128x128xf32>
    %c0_21 = arith.constant 0 : index
    %c0_22 = arith.constant 0 : index
    %26 = vector.load %arg4[%c0_21, %c0_22] : memref<128x128xf32, #tpu.memory_space<vmem>>, vector<128x128xf32>
    tpu.vector_store %arg4[%c0_21, %c0_22], %25 {strides = array<i32>} : memref<128x128xf32, #tpu.memory_space<vmem>>, vector<128x128xf32>,
    return
  }
  func.func @transform_0(%arg0: i32) -> (i32, i32) {
    %c0_i32 = arith.constant 0 : i32
    %c0_i32_0 = arith.constant 0 : i32
    return %arg0, %c0_i32 : i32, i32
  }
  func.func @transform_1(%arg0: i32) -> (i32, i32, i32) {
    %c0_i32 = arith.constant 0 : i32
    %c0_i32_0 = arith.constant 0 : i32
    %c0_i32_1 = arith.constant 0 : i32
    %c0_i32_2 = arith.constant 0 : i32
    return %c0_i32, %c0_i32_0, %c0_i32_1 : i32, i32, i32
  }
  func.func @transform_2(%arg0: i32) -> (i32, i32, i32) {
    %c0_i32 = arith.constant 0 : i32
    %c0_i32_0 = arith.constant 0 : i32
    %c0_i32_1 = arith.constant 0 : i32
    %c0_i32_2 = arith.constant 0 : i32
    return %c0_i32, %c0_i32_0, %c0_i32_1 : i32, i32, i32
  }
  func.func @transform_3(%arg0: i32) -> (i32, i32) {
    %c0_i32 = arith.constant 0 : i32
    %c0_i32_0 = arith.constant 0 : i32
    return %arg0, %c0_i32 : i32, i32
  }
}

</mosaic_0001>

<llo_original>
// kernel: tpu_custom_call.1
$region0: #{tpu_custom_call.1}
  #allocation0 [shape = 'u32[]', space=smem, size = 0x4, offset = 0x4, fixed_abs, tag = 'smem constant byte address 0x4 - core index']
  #allocation1 [shape = 'u32[144,128]{1,0:T(1,128)}', space=vmem, size = 0x12000, scoped, tag = 'internal scratch']
  %s0 = inlined_call_operand.hbm [shape: f32[256,128], index: 0, kind: input, shape index: {}]
  %s1 = inlined_call_operand.hbm [shape: f32[3,128,128], index: 1, kind: input, shape index: {}]
  %s2 = inlined_call_operand.vmem [shape: f32[3,1,128], index: 2, kind: input, shape index: {}]
  %s3 = inlined_call_operand.hbm [shape: f32[256,128], index: 3, kind: output, shape index: {}]
  %s4 = sld [smem:[#allocation0]]
  $region53: #{tpu_custom_call.1} parent=0
    _
  %s6 = ssub.s32 1, %s4
  %s7 = scalar_select 0, %s6, %s4
  $region1: #{tpu_custom_call.1} parent=0
    #allocation2 [shape = 'u8[131072]{0}', space=vmem, size = 0x20000, scoped, tag = 'input window, operand 0']
    #allocation3 [shape = 's32[2]{0}', space=sflag, size = 0x8, scoped, tag = 'scoped memory for tpu_custom_call.1']
    #allocation4 [shape = 's32[2]{0}', space=sflag, size = 0x8, scoped, tag = 'scoped memory for tpu_custom_call.1']
    #allocation5 [shape = 'u8[196608]{0}', space=vmem, size = 0x30000, scoped, tag = 'input window, operand 1, single buffered']
    #allocation6 [shape = 's32[1]{0}', space=sflag, size = 0x4, scoped, tag = 'scoped memory for tpu_custom_call.1']
    #allocation7 [shape = 'u8[131072]{0}', space=vmem, size = 0x20000, scoped, tag = 'output window, operand 0']
    %8 = vsyncpa [#allocation3], 0
    %s9 = scalar_lea.sflag [#allocation3], 1
    %10 = vsyncpa %s9, 0
    %11 = vsyncpa [#allocation6], 0
    %12 = vsyncpa [#allocation4], 0
    %s13 = scalar_lea.sflag [#allocation4], 1
    %14 = vsyncpa %s13, 0
    loop: start=0, step=1, limit=4
    $region2: #{tpu_custom_call.1} parent=1 // loop_pre_header
      _
    $region3: #{tpu_custom_call.1} parent=1 // loop_header
      %s16 = sphi 0, %s20
      %p17 = scmp.ge.s32.totalorder %s16, 4
      %s26 = sphi 0, %s28
      %s29 = sphi 0, %s26
      %s30 = sphi 0, %s29
      %s46 = sphi 0, %s30
      %s50 = sphi 0, %s50
      %s52 = sphi 0, %s50
      %s53 = sphi 0, %s52
      %s67 = sphi 0, %s53
      %s71 = sphi 0, %s71
      %s73 = sphi 0, %s71
      %s74 = sphi 0, %s73
      %s88 = sphi 0, %s74
      %s94 = sphi 0, %s96
      %s97 = sphi 0, %s94
      %s98 = sphi 0, %s97
      %s114 = sphi 0, %s98
    $region4: #{tpu_custom_call.1} parent=1 // loop_header_branch
      %19 = sbr.rel (%p17) target = $region8
    $region5: #{tpu_custom_call.1} parent=1 // loop_body
      %s21 = ssub.s32 %s16, 1
      %s22 = ssub.s32 %s16, 2
      %s23 = sadd.s32 %s16, 1
      %s24 = ssub.s32 %s16, %s23
      %p25 = scmp.eq.s32.totalorder %s24, 0
      %s27 = sadd.s32 %s26, 1
      %s28 = scalar_select %p25, %s26, %s27
      %p31 = pneg %p25
      %p32 = scmp.eq.s32.totalorder %s16, 1
      %p33 = por %p31, %p32
      %p34 = scmp.ne.s32.totalorder %s26, %s29
      %p35 = scmp.eq.s32.totalorder %s16, 0
      %p36 = por %p34, %p35
      %p37 = scmp.ne.s32.totalorder %s26, %s29
      %p38 = scmp.eq.s32.totalorder %s21, 1
      %p39 = por %p37, %p38
      %p40 = scmp.ne.s32.totalorder %s29, %s30
      %p41 = scmp.eq.s32.totalorder %s21, 0
      %p42 = por %p40, %p41
      %p43 = scmp.ne.s32.totalorder %s29, %s30
      %p44 = scmp.eq.s32.totalorder %s22, 1
      %p45 = por %p43, %p44
      %p47 = scmp.ne.s32.totalorder %s30, %s46
      %p48 = scmp.eq.s32.totalorder %s22, 0
      %p49 = por %p47, %p48
      %s51 = sadd.s32 %s50, 1
      %p54 = scmp.eq.s32.totalorder %s16, 1
      %p55 = scmp.ne.s32.totalorder %s50, %s52
      %p56 = scmp.eq.s32.totalorder %s16, 0
      %p57 = por %p55, %p56
      %p58 = scmp.ne.s32.totalorder %s50, %s52
      %p59 = scmp.eq.s32.totalorder %s21, 1
      %p60 = por %p58, %p59
      %p61 = scmp.ne.s32.totalorder %s52, %s53
      %p62 = scmp.eq.s32.totalorder %s21, 0
      %p63 = por %p61, %p62
      %p64 = scmp.ne.s32.totalorder %s52, %s53
      %p65 = scmp.eq.s32.totalorder %s22, 1
      %p66 = por %p64, %p65
      %p68 = scmp.ne.s32.totalorder %s53, %s67
      %p69 = scmp.eq.s32.totalorder %s22, 0
      %p70 = por %p68, %p69
      %s72 = sadd.s32 %s71, 1
      %p75 = scmp.eq.s32.totalorder %s16, 1
      %p76 = scmp.ne.s32.totalorder %s71, %s73
      %p77 = scmp.eq.s32.totalorder %s16, 0
      %p78 = por %p76, %p77
      %p79 = scmp.ne.s32.totalorder %s71, %s73
      %p80 = scmp.eq.s32.totalorder %s21, 1
      %p81 = por %p79, %p80
      %p82 = scmp.ne.s32.totalorder %s73, %s74
      %p83 = scmp.eq.s32.totalorder %s21, 0
      %p84 = por %p82, %p83
      %p85 = scmp.ne.s32.totalorder %s73, %s74
      %p86 = scmp.eq.s32.totalorder %s22, 1
      %p87 = por %p85, %p86
      %p89 = scmp.ne.s32.totalorder %s74, %s88
      %p90 = scmp.eq.s32.totalorder %s22, 0
      %p91 = por %p89, %p90
      %s92 = ssub.s32 %s16, %s23
      %p93 = scmp.eq.s32.totalorder %s92, 0
      %s95 = sadd.s32 %s94, 1
      %s96 = scalar_select %p93, %s94, %s95
      %p99 = pneg %p93
      %p100 = scmp.eq.s32.totalorder %s16, 1
      %p101 = por %p99, %p100
      %p102 = scmp.ne.s32.totalorder %s94, %s97
      %p103 = scmp.eq.s32.totalorder %s16, 0
      %p104 = por %p102, %p103
      %p105 = scmp.ne.s32.totalorder %s94, %s97
      %p106 = scmp.eq.s32.totalorder %s21, 1
      %p107 = por %p105, %p106
      %p108 = scmp.ne.s32.totalorder %s97, %s98
      %p109 = scmp.eq.s32.totalorder %s21, 0
      %p110 = por %p108, %p109
      %p111 = scmp.ne.s32.totalorder %s97, %s98
      %p112 = scmp.eq.s32.totalorder %s22, 1
      %p113 = por %p111, %p112
      %p115 = scmp.ne.s32.totalorder %s98, %s114
      %p116 = scmp.eq.s32.totalorder %s22, 0
      %p117 = por %p115, %p116
      %p118 = scmp.le.s32.totalorder 1, %s16
      %p119 = scmp.lt.s32.totalorder %s16, 3
      %p120 = pnand %p118, %p119
      %p121 = pneg %p120
      // Predicated region
      $region9: #{tpu_custom_call.1} parent=5 // pred_check
        _
      $region10: #{tpu_custom_call.1} parent=5 // pred_check_branch
        %123 = sbr.rel (%p120) target = $region12
      $region11: #{tpu_custom_call.1} parent=5 // pred_region
        %s124 = ssub.s32 %s16, 1
        // Predicated region
        $region13: #{tpu_custom_call.1} parent=11 // pred_check
          %p125 = pneg %p63
        $region14: #{tpu_custom_call.1} parent=11 // pred_check_branch
          %127 = sbr.rel (%p125) target = $region16
        $region15: #{tpu_custom_call.1} parent=11 // pred_region
          %s129 = ssub.s32 6144, 6144
          %130 = vsyncadd [#allocation6], %s129
          %s131 = sshll.u32 [#allocation5], 4
          %s132 = int_to_ptr.vmem [resolvable:$true] %s131
          %137 = dma.hbm_to_vmem [thread:$0]  %s1, 6144, %s132, [#allocation6], 128, 128, 8
        $region16: #{tpu_custom_call.1} parent=11 // pred_fallthru
          _
        // Predicated region
        $region17: #{tpu_custom_call.1} parent=11 // pred_check
          %p138 = pneg %p84
        $region18: #{tpu_custom_call.1} parent=11 // pred_check_branch
          %140 = sbr.rel (%p138) target = $region20
        $region19: #{tpu_custom_call.1} parent=11 // pred_region
          _
        $region20: #{tpu_custom_call.1} parent=11 // pred_fallthru
          _
      $region12: #{tpu_custom_call.1} parent=5 // pred_fallthru
        _
      %p141 = scmp.lt.s32.totalorder %s16, 2
      // Predicated region
      $region21: #{tpu_custom_call.1} parent=5 // pred_check
        %p142 = pneg %p141
      $region22: #{tpu_custom_call.1} parent=5 // pred_check_branch
        %144 = sbr.rel (%p142) target = $region24
      $region23: #{tpu_custom_call.1} parent=5 // pred_region
        // Predicated region
        $region25: #{tpu_custom_call.1} parent=23 // pred_check
          %p145 = pneg %p36
        $region26: #{tpu_custom_call.1} parent=23 // pred_check_branch
          %147 = sbr.rel (%p145) target = $region28
        $region27: #{tpu_custom_call.1} parent=23 // pred_region
          %s148 = sand.u32 %s26, 1
          %s149 = scalar_lea.sflag [#allocation3], %s148
          %s150 = sand.u32 %s26, 1
          %s151 = smul.addr %s150, 128
          %s152 = scalar_lea.vmem [#allocation2], %s151
          %s153 = smul.u32 16, %s16
          %s155 = ssub.s32 2048, 2048
          %156 = vsyncadd %s149, %s155
          %s157 = smul.addr %s153, 128
          %s158 = scalar_lea.hbm %s0, %s157
          %s159 = sshll.u32 %s152, 4
          %s160 = int_to_ptr.vmem [resolvable:$true] %s159
          %165 = dma.hbm_to_vmem [thread:$0]  %s158, 2048, %s160, %s149, 128, 128, 8
        $region28: #{tpu_custom_call.1} parent=23 // pred_fallthru
          _
      $region24: #{tpu_custom_call.1} parent=5 // pred_fallthru
        _
      %p166 = scmp.le.s32.totalorder 1, %s16
      %p167 = scmp.lt.s32.totalorder %s16, 3
      %p168 = pnand %p166, %p167
      %p169 = pneg %p168
      // Predicated region
      $region29: #{tpu_custom_call.1} parent=5 // pred_check
        _
      $region30: #{tpu_custom_call.1} parent=5 // pred_check_branch
        %171 = sbr.rel (%p168) target = $region32
      $region31: #{tpu_custom_call.1} parent=5 // pred_region
        %s172 = ssub.s32 %s16, 1
        %s173 = sand.u32 %s29, 1
        %s174 = scalar_lea.sflag [#allocation3], %s173
        %s175 = sand.u32 %s29, 1
        %s176 = smul.addr %s175, 128
        %s177 = scalar_lea.vmem [#allocation2], %s176
        // Predicated region
        $region33: #{tpu_custom_call.1} parent=31 // pred_check
          %p178 = pneg %p42
        $region34: #{tpu_custom_call.1} parent=31 // pred_check_branch
          %180 = sbr.rel (%p178) target = $region36
        $region35: #{tpu_custom_call.1} parent=31 // pred_region
          %181 = dma.done %s174, 2048
        $region36: #{tpu_custom_call.1} parent=31 // pred_fallthru
          _
        // Predicated region
        $region37: #{tpu_custom_call.1} parent=31 // pred_check
          %p182 = pneg %p63
        $region38: #{tpu_custom_call.1} parent=31 // pred_check_branch
          %184 = sbr.rel (%p182) target = $region40
        $region39: #{tpu_custom_call.1} parent=31 // pred_region
          %185 = dma.done [#allocation6], 6144
        $region40: #{tpu_custom_call.1} parent=31 // pred_fallthru
          _
        %s186 = sand.u32 %s29, 1
        %s187 = scalar_lea.sflag [#allocation3], %s186
        %s188 = sand.u32 %s29, 1
        %s189 = smul.addr %s188, 128
        %s190 = scalar_lea.vmem [#allocation2], %s189
        %p191 = pneg %p42
        %p192 = pneg %p39
        %p193 = pneg %p63
        %p194 = pneg %p60
        %p195 = pneg %p84
        %p196 = pneg %p81
        %p197 = pneg %p110
        %p198 = pneg %p107
        %s199 = sand.u32 %s97, 1
        %s200 = scalar_lea.sflag [#allocation4], %s199
        %s201 = sand.u32 %s97, 1
        %s202 = smul.addr %s201, 128
        %s203 = scalar_lea.vmem [#allocation7], %s202
        %s204 = smul.u32 16, %s21
        %s205 = smul.u32 16, %s21
        %v206 = vld [vmem:[%s177] sm:$0xff]
        %v207 = vld [vmem:[%s177 + $0x8] sm:$0xff]
        %v208 = vld [vmem:[%s177 + $0x10] sm:$0xff]
        %v209 = vld [vmem:[%s177 + $0x18] sm:$0xff]
        %v210 = vld [vmem:[%s177 + $0x20] sm:$0xff]
        %v211 = vld [vmem:[%s177 + $0x28] sm:$0xff]
        %v212 = vld [vmem:[%s177 + $0x30] sm:$0xff]
        %v213 = vld [vmem:[%s177 + $0x38] sm:$0xff]
        %v214 = vld [vmem:[%s177 + $0x40] sm:$0xff]
        %v215 = vld [vmem:[%s177 + $0x48] sm:$0xff]
        %v216 = vld [vmem:[%s177 + $0x50] sm:$0xff]
        %v217 = vld [vmem:[%s177 + $0x58] sm:$0xff]
        %v218 = vld [vmem:[%s177 + $0x60] sm:$0xff]
        %v219 = vld [vmem:[%s177 + $0x68] sm:$0xff]
        %v220 = vld [vmem:[%s177 + $0x70] sm:$0xff]
        %v221 = vld [vmem:[%s177 + $0x78] sm:$0xff]
        %v222 = vld [vmem:[#allocation5] sm:$0xff]
        %v223 = vld [vmem:[#allocation5 + $0x8] sm:$0xff]
        %v224 = vld [vmem:[#allocation5 + $0x10] sm:$0xff]
        %v225 = vld [vmem:[#allocation5 + $0x18] sm:$0xff]
        %v226 = vld [vmem:[#allocation5 + $0x20] sm:$0xff]
        %v227 = vld [vmem:[#allocation5 + $0x28] sm:$0xff]
        %v228 = vld [vmem:[#allocation5 + $0x30] sm:$0xff]
        %v229 = vld [vmem:[#allocation5 + $0x38] sm:$0xff]
        %v230 = vld [vmem:[#allocation5 + $0x40] sm:$0xff]
        %v231 = vld [vmem:[#allocation5 + $0x48] sm:$0xff]
        %v232 = vld [vmem:[#allocation5 + $0x50] sm:$0xff]
        %v233 = vld [vmem:[#allocation5 + $0x58] sm:$0xff]
        %v234 = vld [vmem:[#allocation5 + $0x60] sm:$0xff]
        %v235 = vld [vmem:[#allocation5 + $0x68] sm:$0xff]
        %v236 = vld [vmem:[#allocation5 + $0x70] sm:$0xff]
        %v237 = vld [vmem:[#allocation5 + $0x78] sm:$0xff]
        %v238 = vld [vmem:[%s2] sm:$0x1]
        %v240 = vlaneseq
        %v241 = vshrl.u32 %v240, 7
        %v242 = vsub.s32 0, %v241
        %v243 = vrot.slane %v238, %v242
        %245 = vmatprep.subr.mxu0 0.0
        %246 = vmatpush1.msra.mxu0 %v222
        %247 = vmatprep.subr.mxu0 0.0
        %248 = vmatpush1.msra.mxu0 %v223
        %249 = vmatprep.subr.mxu0 0.0
        %250 = vmatpush1.msra.mxu0 %v224
        %251 = vmatprep.subr.mxu0 0.0
        %252 = vmatpush1.msra.mxu0 %v225
        %253 = vmatprep.subr.mxu0 0.0
        %254 = vmatpush1.msra.mxu0 %v226
        %255 = vmatprep.subr.mxu0 0.0
        %256 = vmatpush1.msra.mxu0 %v227
        %257 = vmatprep.subr.mxu0 0.0
        %258 = vmatpush1.msra.mxu0 %v228
        %259 = vmatprep.subr.mxu0 0.0
        %260 = vmatpush1.msra.mxu0 %v229
        %261 = vmatprep.subr.mxu0 0.0
        %262 = vmatpush1.msra.mxu0 %v230
        %263 = vmatprep.subr.mxu0 0.0
        %264 = vmatpush1.msra.mxu0 %v231
        %265 = vmatprep.subr.mxu0 0.0
        %266 = vmatpush1.msra.mxu0 %v232
        %267 = vmatprep.subr.mxu0 0.0
        %268 = vmatpush1.msra.mxu0 %v233
        %269 = vmatprep.subr.mxu0 0.0
        %270 = vmatpush1.msra.mxu0 %v234
        %271 = vmatprep.subr.mxu0 0.0
        %272 = vmatpush1.msra.mxu0 %v235
        %273 = vmatprep.subr.mxu0 0.0
        %274 = vmatpush1.msra.mxu0 %v236
        %275 = vmatprep.subr.mxu0 0.0
        %276 = vmatpush1.msra.mxu0 %v237
        %277 = vmatprep.subr.mxu0 0.0
        %278 = vmatpush1.msra.mxu0 0.0
        %279 = vmatprep.subr.mxu0 0.0
        %280 = vmatpush1.msra.mxu0 0.0
        %281 = vmatprep.subr.mxu0 0.0
        %282 = vmatpush1.msra.mxu0 0.0
        %283 = vmatprep.subr.mxu0 0.0
        %284 = vmatpush1.msra.mxu0 0.0
        %285 = vmatprep.subr.mxu0 0.0
        %286 = vmatpush1.msra.mxu0 0.0
        %287 = vmatprep.subr.mxu0 0.0
        %288 = vmatpush1.msra.mxu0 0.0
        %289 = vmatprep.subr.mxu0 0.0
        %290 = vmatpush1.msra.mxu0 0.0
        %291 = vmatprep.subr.mxu0 0.0
        %292 = vmatpush1.msra.mxu0 0.0
        %293 = vmatprep.subr.mxu0 0.0
        %294 = vmatpush1.msra.mxu0 0.0
        %295 = vmatprep.subr.mxu0 0.0
        %296 = vmatpush1.msra.mxu0 0.0
        %297 = vmatprep.subr.mxu0 0.0
        %298 = vmatpush1.msra.mxu0 0.0
        %299 = vmatprep.subr.mxu0 0.0
        %300 = vmatpush1.msra.mxu0 0.0
        %301 = vmatprep.subr.mxu0 0.0
        %302 = vmatpush1.msra.mxu0 0.0
        %303 = vmatprep.subr.mxu0 0.0
        %304 = vmatpush1.msra.mxu0 0.0
        %305 = vmatprep.subr.mxu0 0.0
        %306 = vmatpush1.msra.mxu0 0.0
        %307 = vmatprep.subr.mxu0 0.0
        %308 = vmatpush1.msra.mxu0 0.0
        %309 = vmatprep.mubr.f32.mxu0 0.0
        %310 = vmatmul.mubr.f32.gmra.mrb[0].mxu0 %v206
        %v311 = vpop.f32.mrb[0].mxu0
        %v312 = vadd.f32 %v243, %v311
        %v313 = vpop.f32.mrb[0].mxu0
        %314 = vmatprep.mubr.f32.mxu0 0.0
        %315 = vmatmul.mubr.f32.gmra.mrb[0].mxu0 %v207
        %v316 = vpop.f32.mrb[0].mxu0
        %v317 = vadd.f32 %v243, %v316
        %v318 = vpop.f32.mrb[0].mxu0
        %319 = vmatprep.mubr.f32.mxu0 0.0
        %320 = vmatmul.mubr.f32.gmra.mrb[0].mxu0 %v208
        %v321 = vpop.f32.mrb[0].mxu0
        %v322 = vadd.f32 %v243, %v321
        %v323 = vpop.f32.mrb[0].mxu0
        %324 = vmatprep.mubr.f32.mxu0 0.0
        %325 = vmatmul.mubr.f32.gmra.mrb[0].mxu0 %v209
        %v326 = vpop.f32.mrb[0].mxu0
        %v327 = vadd.f32 %v243, %v326
        %v328 = vpop.f32.mrb[0].mxu0
        %329 = vmatprep.mubr.f32.mxu0 0.0
        %330 = vmatmul.mubr.f32.gmra.mrb[0].mxu0 %v210
        %v331 = vpop.f32.mrb[0].mxu0
        %v332 = vadd.f32 %v243, %v331
        %v333 = vpop.f32.mrb[0].mxu0
        %334 = vmatprep.mubr.f32.mxu0 0.0
        %335 = vmatmul.mubr.f32.gmra.mrb[0].mxu0 %v211
        %v336 = vpop.f32.mrb[0].mxu0
        %v337 = vadd.f32 %v243, %v336
        %v338 = vpop.f32.mrb[0].mxu0
        %339 = vmatprep.mubr.f32.mxu0 0.0
        %340 = vmatmul.mubr.f32.gmra.mrb[0].mxu0 %v212
        %v341 = vpop.f32.mrb[0].mxu0
        %v342 = vadd.f32 %v243, %v341
        %v343 = vpop.f32.mrb[0].mxu0
        %344 = vmatprep.mubr.f32.mxu0 0.0
        %345 = vmatmul.mubr.f32.gmra.mrb[0].mxu0 %v213
        %v346 = vpop.f32.mrb[0].mxu0
        %v347 = vadd.f32 %v243, %v346
        %v348 = vpop.f32.mrb[0].mxu0
        %349 = vmatprep.mubr.f32.mxu0 0.0
        %350 = vmatmul.mubr.f32.gmra.mrb[0].mxu0 %v214
        %v351 = vpop.f32.mrb[0].mxu0
        %v352 = vadd.f32 %v243, %v351
        %v353 = vpop.f32.mrb[0].mxu0
        %354 = vmatprep.mubr.f32.mxu0 0.0
        %355 = vmatmul.mubr.f32.gmra.mrb[0].mxu0 %v215
        %v356 = vpop.f32.mrb[0].mxu0
        %v357 = vadd.f32 %v243, %v356
        %v358 = vpop.f32.mrb[0].mxu0
        %359 = vmatprep.mubr.f32.mxu0 0.0
        %360 = vmatmul.mubr.f32.gmra.mrb[0].mxu0 %v216
        %v361 = vpop.f32.mrb[0].mxu0
        %v362 = vadd.f32 %v243, %v361
        %v363 = vpop.f32.mrb[0].mxu0
        %364 = vmatprep.mubr.f32.mxu0 0.0
        %365 = vmatmul.mubr.f32.gmra.mrb[0].mxu0 %v217
        %v366 = vpop.f32.mrb[0].mxu0
        %v367 = vadd.f32 %v243, %v366
        %v368 = vpop.f32.mrb[0].mxu0
        %369 = vmatprep.mubr.f32.mxu0 0.0
        %370 = vmatmul.mubr.f32.gmra.mrb[0].mxu0 %v218
        %v371 = vpop.f32.mrb[0].mxu0
        %v372 = vadd.f32 %v243, %v371
        %v373 = vpop.f32.mrb[0].mxu0
        %374 = vmatprep.mubr.f32.mxu0 0.0
        %375 = vmatmul.mubr.f32.gmra.mrb[0].mxu0 %v219
        %v376 = vpop.f32.mrb[0].mxu0
        %v377 = vadd.f32 %v243, %v376
        %v378 = vpop.f32.mrb[0].mxu0
        %379 = vmatprep.mubr.f32.mxu0 0.0
        %380 = vmatmul.mubr.f32.gmra.mrb[0].mxu0 %v220
        %v381 = vpop.f32.mrb[0].mxu0
        %v382 = vadd.f32 %v243, %v381
        %v383 = vpop.f32.mrb[0].mxu0
        %384 = vmatprep.mubr.f32.mxu0 0.0
        %385 = vmatmul.mubr.f32.gmra.mrb[0].mxu0 %v221
        %v386 = vpop.f32.mrb[0].mxu0
        %v387 = vadd.f32 %v243, %v386
        %v388 = vpop.f32.mrb[0].mxu0
        %389 = vdwg.mxu0
        %v390 = vmax.f32 %v312, 0.0
        %v391 = vmax.f32 %v317, 0.0
        %v392 = vmax.f32 %v322, 0.0
        %v393 = vmax.f32 %v327, 0.0
        %v394 = vmax.f32 %v332, 0.0
        %v395 = vmax.f32 %v337, 0.0
        %v396 = vmax.f32 %v342, 0.0
        %v397 = vmax.f32 %v347, 0.0
        %v398 = vmax.f32 %v352, 0.0
        %v399 = vmax.f32 %v357, 0.0
        %v400 = vmax.f32 %v362, 0.0
        %v401 = vmax.f32 %v367, 0.0
        %v402 = vmax.f32 %v372, 0.0
        %v403 = vmax.f32 %v377, 0.0
        %v404 = vmax.f32 %v382, 0.0
        %v405 = vmax.f32 %v387, 0.0
        %s406 = scalar_lea.vmem [#allocation5], 128
        %v407 = vld [vmem:[%s406] sm:$0xff]
        %v408 = vld [vmem:[%s406 + $0x8] sm:$0xff]
        %v409 = vld [vmem:[%s406 + $0x10] sm:$0xff]
        %v410 = vld [vmem:[%s406 + $0x18] sm:$0xff]
        %v411 = vld [vmem:[%s406 + $0x20] sm:$0xff]
        %v412 = vld [vmem:[%s406 + $0x28] sm:$0xff]
        %v413 = vld [vmem:[%s406 + $0x30] sm:$0xff]
        %v414 = vld [vmem:[%s406 + $0x38] sm:$0xff]
        %v415 = vld [vmem:[%s406 + $0x40] sm:$0xff]
        %v416 = vld [vmem:[%s406 + $0x48] sm:$0xff]
        %v417 = vld [vmem:[%s406 + $0x50] sm:$0xff]
        %v418 = vld [vmem:[%s406 + $0x58] sm:$0xff]
        %v419 = vld [vmem:[%s406 + $0x60] sm:$0xff]
        %v420 = vld [vmem:[%s406 + $0x68] sm:$0xff]
        %v421 = vld [vmem:[%s406 + $0x70] sm:$0xff]
        %v422 = vld [vmem:[%s406 + $0x78] sm:$0xff]
        %s423 = scalar_lea.vmem %s2, 1
        %v424 = vld [vmem:[%s423] sm:$0x1]
        %v426 = vlaneseq
        %v427 = vshrl.u32 %v426, 7
        %v428 = vsub.s32 0, %v427
        %v429 = vrot.slane %v424, %v428
        %431 = vmatprep.subr.mxu0 0.0
        %432 = vmatpush1.msra.mxu0 %v407
        %433 = vmatprep.subr.mxu0 0.0
        %434 = vmatpush1.msra.mxu0 %v408
        %435 = vmatprep.subr.mxu0 0.0
        %436 = vmatpush1.msra.mxu0 %v409
        %437 = vmatprep.subr.mxu0 0.0
        %438 = vmatpush1.msra.mxu0 %v410
        %439 = vmatprep.subr.mxu0 0.0
        %440 = vmatpush1.msra.mxu0 %v411
        %441 = vmatprep.subr.mxu0 0.0
        %442 = vmatpush1.msra.mxu0 %v412
        %443 = vmatprep.subr.mxu0 0.0
        %444 = vmatpush1.msra.mxu0 %v413
        %445 = vmatprep.subr.mxu0 0.0
        %446 = vmatpush1.msra.mxu0 %v414
        %447 = vmatprep.subr.mxu0 0.0
        %448 = vmatpush1.msra.mxu0 %v415
        %449 = vmatprep.subr.mxu0 0.0
        %450 = vmatpush1.msra.mxu0 %v416
        %451 = vmatprep.subr.mxu0 0.0
        %452 = vmatpush1.msra.mxu0 %v417
        %453 = vmatprep.subr.mxu0 0.0
        %454 = vmatpush1.msra.mxu0 %v418
        %455 = vmatprep.subr.mxu0 0.0
        %456 = vmatpush1.msra.mxu0 %v419
        %457 = vmatprep.subr.mxu0 0.0
        %458 = vmatpush1.msra.mxu0 %v420
        %459 = vmatprep.subr.mxu0 0.0
        %460 = vmatpush1.msra.mxu0 %v421
        %461 = vmatprep.subr.mxu0 0.0
        %462 = vmatpush1.msra.mxu0 %v422
        %463 = vmatprep.subr.mxu0 0.0
        %464 = vmatpush1.msra.mxu0 0.0
        %465 = vmatprep.subr.mxu0 0.0
        %466 = vmatpush1.msra.mxu0 0.0
        %467 = vmatprep.subr.mxu0 0.0
        %468 = vmatpush1.msra.mxu0 0.0
        %469 = vmatprep.subr.mxu0 0.0
        %470 = vmatpush1.msra.mxu0 0.0
        %471 = vmatprep.subr.mxu0 0.0
        %472 = vmatpush1.msra.mxu0 0.0
        %473 = vmatprep.subr.mxu0 0.0
        %474 = vmatpush1.msra.mxu0 0.0
        %475 = vmatprep.subr.mxu0 0.0
        %476 = vmatpush1.msra.mxu0 0.0
        %477 = vmatprep.subr.mxu0 0.0
        %478 = vmatpush1.msra.mxu0 0.0
        %479 = vmatprep.subr.mxu0 0.0
        %480 = vmatpush1.msra.mxu0 0.0
        %481 = vmatprep.subr.mxu0 0.0
        %482 = vmatpush1.msra.mxu0 0.0
        %483 = vmatprep.subr.mxu0 0.0
        %484 = vmatpush1.msra.mxu0 0.0
        %485 = vmatprep.subr.mxu0 0.0
        %486 = vmatpush1.msra.mxu0 0.0
        %487 = vmatprep.subr.mxu0 0.0
        %488 = vmatpush1.msra.mxu0 0.0
        %489 = vmatprep.subr.mxu0 0.0
        %490 = vmatpush1.msra.mxu0 0.0
        %491 = vmatprep.subr.mxu0 0.0
        %492 = vmatpush1.msra.mxu0 0.0
        %493 = vmatprep.subr.mxu0 0.0
        %494 = vmatpush1.msra.mxu0 0.0
        %495 = vmatprep.mubr.f32.mxu0 0.0
        %496 = vmatmul.mubr.f32.gmra.mrb[0].mxu0 %v390
        %v497 = vpop.f32.mrb[0].mxu0
        %v498 = vadd.f32 %v429, %v497
        %v499 = vpop.f32.mrb[0].mxu0
        %500 = vmatprep.mubr.f32.mxu0 0.0
        %501 = vmatmul.mubr.f32.gmra.mrb[0].mxu0 %v391
        %v502 = vpop.f32.mrb[0].mxu0
        %v503 = vadd.f32 %v429, %v502
        %v504 = vpop.f32.mrb[0].mxu0
        %505 = vmatprep.mubr.f32.mxu0 0.0
        %506 = vmatmul.mubr.f32.gmra.mrb[0].mxu0 %v392
        %v507 = vpop.f32.mrb[0].mxu0
        %v508 = vadd.f32 %v429, %v507
        %v509 = vpop.f32.mrb[0].mxu0
        %510 = vmatprep.mubr.f32.mxu0 0.0
        %511 = vmatmul.mubr.f32.gmra.mrb[0].mxu0 %v393
        %v512 = vpop.f32.mrb[0].mxu0
        %v513 = vadd.f32 %v429, %v512
        %v514 = vpop.f32.mrb[0].mxu0
        %515 = vmatprep.mubr.f32.mxu0 0.0
        %516 = vmatmul.mubr.f32.gmra.mrb[0].mxu0 %v394
        %v517 = vpop.f32.mrb[0].mxu0
        %v518 = vadd.f32 %v429, %v517
        %v519 = vpop.f32.mrb[0].mxu0
        %520 = vmatprep.mubr.f32.mxu0 0.0
        %521 = vmatmul.mubr.f32.gmra.mrb[0].mxu0 %v395
        %v522 = vpop.f32.mrb[0].mxu0
        %v523 = vadd.f32 %v429, %v522
        %v524 = vpop.f32.mrb[0].mxu0
        %525 = vmatprep.mubr.f32.mxu0 0.0
        %526 = vmatmul.mubr.f32.gmra.mrb[0].mxu0 %v396
        %v527 = vpop.f32.mrb[0].mxu0
        %v528 = vadd.f32 %v429, %v527
        %v529 = vpop.f32.mrb[0].mxu0
        %530 = vmatprep.mubr.f32.mxu0 0.0
        %531 = vmatmul.mubr.f32.gmra.mrb[0].mxu0 %v397
        %v532 = vpop.f32.mrb[0].mxu0
        %v533 = vadd.f32 %v429, %v532
        %v534 = vpop.f32.mrb[0].mxu0
        %535 = vmatprep.mubr.f32.mxu0 0.0
        %536 = vmatmul.mubr.f32.gmra.mrb[0].mxu0 %v398
        %v537 = vpop.f32.mrb[0].mxu0
        %v538 = vadd.f32 %v429, %v537
        %v539 = vpop.f32.mrb[0].mxu0
        %540 = vmatprep.mubr.f32.mxu0 0.0
        %541 = vmatmul.mubr.f32.gmra.mrb[0].mxu0 %v399
        %v542 = vpop.f32.mrb[0].mxu0
        %v543 = vadd.f32 %v429, %v542
        %v544 = vpop.f32.mrb[0].mxu0
        %545 = vmatprep.mubr.f32.mxu0 0.0
        %546 = vmatmul.mubr.f32.gmra.mrb[0].mxu0 %v400
        %v547 = vpop.f32.mrb[0].mxu0
        %v548 = vadd.f32 %v429, %v547
        %v549 = vpop.f32.mrb[0].mxu0
        %550 = vmatprep.mubr.f32.mxu0 0.0
        %551 = vmatmul.mubr.f32.gmra.mrb[0].mxu0 %v401
        %v552 = vpop.f32.mrb[0].mxu0
        %v553 = vadd.f32 %v429, %v552
        %v554 = vpop.f32.mrb[0].mxu0
        %555 = vmatprep.mubr.f32.mxu0 0.0
        %556 = vmatmul.mubr.f32.gmra.mrb[0].mxu0 %v402
        %v557 = vpop.f32.mrb[0].mxu0
        %v558 = vadd.f32 %v429, %v557
        %v559 = vpop.f32.mrb[0].mxu0
        %560 = vmatprep.mubr.f32.mxu0 0.0
        %561 = vmatmul.mubr.f32.gmra.mrb[0].mxu0 %v403
        %v562 = vpop.f32.mrb[0].mxu0
        %v563 = vadd.f32 %v429, %v562
        %v564 = vpop.f32.mrb[0].mxu0
        %565 = vmatprep.mubr.f32.mxu0 0.0
        %566 = vmatmul.mubr.f32.gmra.mrb[0].mxu0 %v404
        %v567 = vpop.f32.mrb[0].mxu0
        %v568 = vadd.f32 %v429, %v567
        %v569 = vpop.f32.mrb[0].mxu0
        %570 = vmatprep.mubr.f32.mxu0 0.0
        %571 = vmatmul.mubr.f32.gmra.mrb[0].mxu0 %v405
        %v572 = vpop.f32.mrb[0].mxu0
        %v573 = vadd.f32 %v429, %v572
        %v574 = vpop.f32.mrb[0].mxu0
        %575 = vdwg.mxu0
        %v576 = vmax.f32 %v498, 0.0
        %v577 = vmax.f32 %v503, 0.0
        %v578 = vmax.f32 %v508, 0.0
        %v579 = vmax.f32 %v513, 0.0
        %v580 = vmax.f32 %v518, 0.0
        %v581 = vmax.f32 %v523, 0.0
        %v582 = vmax.f32 %v528, 0.0
        %v583 = vmax.f32 %v533, 0.0
        %v584 = vmax.f32 %v538, 0.0
        %v585 = vmax.f32 %v543, 0.0
        %v586 = vmax.f32 %v548, 0.0
        %v587 = vmax.f32 %v553, 0.0
        %v588 = vmax.f32 %v558, 0.0
        %v589 = vmax.f32 %v563, 0.0
        %v590 = vmax.f32 %v568, 0.0
        %v591 = vmax.f32 %v573, 0.0
        %s592 = scalar_lea.vmem [#allocation5], 256
        %v593 = vld [vmem:[%s592] sm:$0xff]
        %v594 = vld [vmem:[%s592 + $0x8] sm:$0xff]
        %v595 = vld [vmem:[%s592 + $0x10] sm:$0xff]
        %v596 = vld [vmem:[%s592 + $0x18] sm:$0xff]
        %v597 = vld [vmem:[%s592 + $0x20] sm:$0xff]
        %v598 = vld [vmem:[%s592 + $0x28] sm:$0xff]
        %v599 = vld [vmem:[%s592 + $0x30] sm:$0xff]
        %v600 = vld [vmem:[%s592 + $0x38] sm:$0xff]
        %v601 = vld [vmem:[%s592 + $0x40] sm:$0xff]
        %v602 = vld [vmem:[%s592 + $0x48] sm:$0xff]
        %v603 = vld [vmem:[%s592 + $0x50] sm:$0xff]
        %v604 = vld [vmem:[%s592 + $0x58] sm:$0xff]
        %v605 = vld [vmem:[%s592 + $0x60] sm:$0xff]
        %v606 = vld [vmem:[%s592 + $0x68] sm:$0xff]
        %v607 = vld [vmem:[%s592 + $0x70] sm:$0xff]
        %v608 = vld [vmem:[%s592 + $0x78] sm:$0xff]
        %s609 = scalar_lea.vmem %s2, 2
        %v610 = vld [vmem:[%s609] sm:$0x1]
        %v612 = vlaneseq
        %v613 = vshrl.u32 %v612, 7
        %v614 = vsub.s32 0, %v613
        %v615 = vrot.slane %v610, %v614
        %617 = vmatprep.subr.mxu0 0.0
        %618 = vmatpush1.msra.mxu0 %v593
        %619 = vmatprep.subr.mxu0 0.0
        %620 = vmatpush1.msra.mxu0 %v594
        %621 = vmatprep.subr.mxu0 0.0
        %622 = vmatpush1.msra.mxu0 %v595
        %623 = vmatprep.subr.mxu0 0.0
        %624 = vmatpush1.msra.mxu0 %v596
        %625 = vmatprep.subr.mxu0 0.0
        %626 = vmatpush1.msra.mxu0 %v597
        %627 = vmatprep.subr.mxu0 0.0
        %628 = vmatpush1.msra.mxu0 %v598
        %629 = vmatprep.subr.mxu0 0.0
        %630 = vmatpush1.msra.mxu0 %v599
        %631 = vmatprep.subr.mxu0 0.0
        %632 = vmatpush1.msra.mxu0 %v600
        %633 = vmatprep.subr.mxu0 0.0
        %634 = vmatpush1.msra.mxu0 %v601
        %635 = vmatprep.subr.mxu0 0.0
        %636 = vmatpush1.msra.mxu0 %v602
        %637 = vmatprep.subr.mxu0 0.0
        %638 = vmatpush1.msra.mxu0 %v603
        %639 = vmatprep.subr.mxu0 0.0
        %640 = vmatpush1.msra.mxu0 %v604
        %641 = vmatprep.subr.mxu0 0.0
        %642 = vmatpush1.msra.mxu0 %v605
        %643 = vmatprep.subr.mxu0 0.0
        %644 = vmatpush1.msra.mxu0 %v606
        %645 = vmatprep.subr.mxu0 0.0
        %646 = vmatpush1.msra.mxu0 %v607
        %647 = vmatprep.subr.mxu0 0.0
        %648 = vmatpush1.msra.mxu0 %v608
        %649 = vmatprep.subr.mxu0 0.0
        %650 = vmatpush1.msra.mxu0 0.0
        %651 = vmatprep.subr.mxu0 0.0
        %652 = vmatpush1.msra.mxu0 0.0
        %653 = vmatprep.subr.mxu0 0.0
        %654 = vmatpush1.msra.mxu0 0.0
        %655 = vmatprep.subr.mxu0 0.0
        %656 = vmatpush1.msra.mxu0 0.0
        %657 = vmatprep.subr.mxu0 0.0
        %658 = vmatpush1.msra.mxu0 0.0
        %659 = vmatprep.subr.mxu0 0.0
        %660 = vmatpush1.msra.mxu0 0.0
        %661 = vmatprep.subr.mxu0 0.0
        %662 = vmatpush1.msra.mxu0 0.0
        %663 = vmatprep.subr.mxu0 0.0
        %664 = vmatpush1.msra.mxu0 0.0
        %665 = vmatprep.subr.mxu0 0.0
        %666 = vmatpush1.msra.mxu0 0.0
        %667 = vmatprep.subr.mxu0 0.0
        %668 = vmatpush1.msra.mxu0 0.0
        %669 = vmatprep.subr.mxu0 0.0
        %670 = vmatpush1.msra.mxu0 0.0
        %671 = vmatprep.subr.mxu0 0.0
        %672 = vmatpush1.msra.mxu0 0.0
        %673 = vmatprep.subr.mxu0 0.0
        %674 = vmatpush1.msra.mxu0 0.0
        %675 = vmatprep.subr.mxu0 0.0
        %676 = vmatpush1.msra.mxu0 0.0
        %677 = vmatprep.subr.mxu0 0.0
        %678 = vmatpush1.msra.mxu0 0.0
        %679 = vmatprep.subr.mxu0 0.0
        %680 = vmatpush1.msra.mxu0 0.0
        %681 = vmatprep.mubr.f32.mxu0 0.0
        %682 = vmatmul.mubr.f32.gmra.mrb[0].mxu0 %v576
        %v683 = vpop.f32.mrb[0].mxu0
        %v684 = vadd.f32 %v615, %v683
        %v685 = vpop.f32.mrb[0].mxu0
        %686 = vmatprep.mubr.f32.mxu0 0.0
        %687 = vmatmul.mubr.f32.gmra.mrb[0].mxu0 %v577
        %v688 = vpop.f32.mrb[0].mxu0
        %v689 = vadd.f32 %v615, %v688
        %v690 = vpop.f32.mrb[0].mxu0
        %691 = vmatprep.mubr.f32.mxu0 0.0
        %692 = vmatmul.mubr.f32.gmra.mrb[0].mxu0 %v578
        %v693 = vpop.f32.mrb[0].mxu0
        %v694 = vadd.f32 %v615, %v693
        %v695 = vpop.f32.mrb[0].mxu0
        %696 = vmatprep.mubr.f32.mxu0 0.0
        %697 = vmatmul.mubr.f32.gmra.mrb[0].mxu0 %v579
        %v698 = vpop.f32.mrb[0].mxu0
        %v699 = vadd.f32 %v615, %v698
        %v700 = vpop.f32.mrb[0].mxu0
        %701 = vmatprep.mubr.f32.mxu0 0.0
        %702 = vmatmul.mubr.f32.gmra.mrb[0].mxu0 %v580
        %v703 = vpop.f32.mrb[0].mxu0
        %v704 = vadd.f32 %v615, %v703
        %v705 = vpop.f32.mrb[0].mxu0
        %706 = vmatprep.mubr.f32.mxu0 0.0
        %707 = vmatmul.mubr.f32.gmra.mrb[0].mxu0 %v581
        %v708 = vpop.f32.mrb[0].mxu0
        %v709 = vadd.f32 %v615, %v708
        %v710 = vpop.f32.mrb[0].mxu0
        %711 = vmatprep.mubr.f32.mxu0 0.0
        %712 = vmatmul.mubr.f32.gmra.mrb[0].mxu0 %v582
        %v713 = vpop.f32.mrb[0].mxu0
        %v714 = vadd.f32 %v615, %v713
        %v715 = vpop.f32.mrb[0].mxu0
        %716 = vmatprep.mubr.f32.mxu0 0.0
        %717 = vmatmul.mubr.f32.gmra.mrb[0].mxu0 %v583
        %v718 = vpop.f32.mrb[0].mxu0
        %v719 = vadd.f32 %v615, %v718
        %v720 = vpop.f32.mrb[0].mxu0
        %721 = vmatprep.mubr.f32.mxu0 0.0
        %722 = vmatmul.mubr.f32.gmra.mrb[0].mxu0 %v584
        %v723 = vpop.f32.mrb[0].mxu0
        %v724 = vadd.f32 %v615, %v723
        %v725 = vpop.f32.mrb[0].mxu0
        %726 = vmatprep.mubr.f32.mxu0 0.0
        %727 = vmatmul.mubr.f32.gmra.mrb[0].mxu0 %v585
        %v728 = vpop.f32.mrb[0].mxu0
        %v729 = vadd.f32 %v615, %v728
        %v730 = vpop.f32.mrb[0].mxu0
        %731 = vmatprep.mubr.f32.mxu0 0.0
        %732 = vmatmul.mubr.f32.gmra.mrb[0].mxu0 %v586
        %v733 = vpop.f32.mrb[0].mxu0
        %v734 = vadd.f32 %v615, %v733
        %v735 = vpop.f32.mrb[0].mxu0
        %736 = vmatprep.mubr.f32.mxu0 0.0
        %737 = vmatmul.mubr.f32.gmra.mrb[0].mxu0 %v587
        %v738 = vpop.f32.mrb[0].mxu0
        %v739 = vadd.f32 %v615, %v738
        %v740 = vpop.f32.mrb[0].mxu0
        %741 = vmatprep.mubr.f32.mxu0 0.0
        %742 = vmatmul.mubr.f32.gmra.mrb[0].mxu0 %v588
        %v743 = vpop.f32.mrb[0].mxu0
        %v744 = vadd.f32 %v615, %v743
        %v745 = vpop.f32.mrb[0].mxu0
        %746 = vmatprep.mubr.f32.mxu0 0.0
        %747 = vmatmul.mubr.f32.gmra.mrb[0].mxu0 %v589
        %v748 = vpop.f32.mrb[0].mxu0
        %v749 = vadd.f32 %v615, %v748
        %v750 = vpop.f32.mrb[0].mxu0
        %751 = vmatprep.mubr.f32.mxu0 0.0
        %752 = vmatmul.mubr.f32.gmra.mrb[0].mxu0 %v590
        %v753 = vpop.f32.mrb[0].mxu0
        %v754 = vadd.f32 %v615, %v753
        %v755 = vpop.f32.mrb[0].mxu0
        %756 = vmatprep.mubr.f32.mxu0 0.0
        %757 = vmatmul.mubr.f32.gmra.mrb[0].mxu0 %v591
        %v758 = vpop.f32.mrb[0].mxu0
        %v759 = vadd.f32 %v615, %v758
        %v760 = vpop.f32.mrb[0].mxu0
        %761 = vdwg.mxu0
        %762 = vst [vmem:[%s203] sm:$0xff] %v684
        %763 = vst [vmem:[%s203 + $0x8] sm:$0xff] %v689
        %764 = vst [vmem:[%s203 + $0x10] sm:$0xff] %v694
        %765 = vst [vmem:[%s203 + $0x18] sm:$0xff] %v699
        %766 = vst [vmem:[%s203 + $0x20] sm:$0xff] %v704
        %767 = vst [vmem:[%s203 + $0x28] sm:$0xff] %v709
        %768 = vst [vmem:[%s203 + $0x30] sm:$0xff] %v714
        %769 = vst [vmem:[%s203 + $0x38] sm:$0xff] %v719
        %770 = vst [vmem:[%s203 + $0x40] sm:$0xff] %v724
        %771 = vst [vmem:[%s203 + $0x48] sm:$0xff] %v729
        %772 = vst [vmem:[%s203 + $0x50] sm:$0xff] %v734
        %773 = vst [vmem:[%s203 + $0x58] sm:$0xff] %v739
        %774 = vst [vmem:[%s203 + $0x60] sm:$0xff] %v744
        %775 = vst [vmem:[%s203 + $0x68] sm:$0xff] %v749
        %776 = vst [vmem:[%s203 + $0x70] sm:$0xff] %v754
        %777 = vst [vmem:[%s203 + $0x78] sm:$0xff] %v759
        %s778 = sand.u32 %s97, 1
        %s779 = scalar_lea.sflag [#allocation4], %s778
        %s780 = sand.u32 %s97, 1
        %s781 = smul.addr %s780, 128
        %s782 = scalar_lea.vmem [#allocation7], %s781
        // Predicated region
        $region41: #{tpu_custom_call.1} parent=31 // pred_check
          %p783 = pneg %p107
        $region42: #{tpu_custom_call.1} parent=31 // pred_check_branch
          %785 = sbr.rel (%p783) target = $region44
        $region43: #{tpu_custom_call.1} parent=31 // pred_region
          %s786 = smul.u32 16, %s21
          %s788 = ssub.s32 2048, 2048
          %789 = vsyncadd %s779, %s788
          %s790 = smul.addr %s786, 128
          %s791 = scalar_lea.hbm %s3, %s790
          %s792 = sshll.u32 %s782, 4
          %s793 = int_to_ptr.vmem [resolvable:$true] %s792
          %798 = dma.vmem_to_hbm [thread:$0]  %s793, 2048, %s791, %s779, 128, 128, 8
        $region44: #{tpu_custom_call.1} parent=31 // pred_fallthru
          _
      $region32: #{tpu_custom_call.1} parent=5 // pred_fallthru
        _
      %p799 = scmp.le.s32.totalorder 2, %s16
      // Predicated region
      $region45: #{tpu_custom_call.1} parent=5 // pred_check
        %p800 = pneg %p799
      $region46: #{tpu_custom_call.1} parent=5 // pred_check_branch
        %802 = sbr.rel (%p800) target = $region48
      $region47: #{tpu_custom_call.1} parent=5 // pred_region
        %s803 = ssub.s32 %s16, 2
        // Predicated region
        $region49: #{tpu_custom_call.1} parent=47 // pred_check
          %p804 = pneg %p113
        $region50: #{tpu_custom_call.1} parent=47 // pred_check_branch
          %806 = sbr.rel (%p804) target = $region52
        $region51: #{tpu_custom_call.1} parent=47 // pred_region
          %s807 = sand.u32 %s98, 1
          %s808 = scalar_lea.sflag [#allocation4], %s807
          %s809 = sand.u32 %s98, 1
          %s810 = smul.addr %s809, 128
          %s811 = scalar_lea.vmem [#allocation7], %s810
          %812 = dma.done %s808, 2048
        $region52: #{tpu_custom_call.1} parent=47 // pred_fallthru
          _
      $region48: #{tpu_custom_call.1} parent=5 // pred_fallthru
        _
    $region6: #{tpu_custom_call.1} parent=1 // loop_footer
      %s20 = sadd.s32 1, %s16
    $region7: #{tpu_custom_call.1} parent=1 // loop_footer_branch
      %15 = sbr.rel target = $region3
    $region8: #{tpu_custom_call.1} parent=1 // loop_exit
      _
    %813 = vsyncpa [#allocation3], 1
    %s814 = scalar_lea.sflag [#allocation3], 1
    %815 = vsyncpa %s814, 1
    %816 = vsyncpa [#allocation6], 1
    %817 = vsyncpa [#allocation4], 1
    %s818 = scalar_lea.sflag [#allocation4], 1
    %819 = vsyncpa %s818, 1

</llo_original>
